<compile_context>
chip_gen: v5e
topology: v5e:2x2
jax: 0.10.0
libtpu: 0.0.40
codegen_flags: <defaults>
</compile_context>

<pallas_src>
import functools
import math

import jax
import jax.numpy as jnp
from jax.experimental import pallas as pl
from jax.experimental.pallas import tpu as pltpu


# ---------------------------------------------------------------------------
# VMEM budget / tiling helpers
# ---------------------------------------------------------------------------

def _vmem_limit_bytes():
    """Scoped-VMEM limit: 3/4 of physical VMEM, capped at 100 MiB.
    v5e/v6e (128 MiB) -> 96 MiB, v7x (64 MiB) -> 48 MiB.  Conservative 64 MiB
    fallback if the hardware query is unavailable."""
    try:
        cap = pltpu.get_tpu_info().vmem_capacity_bytes
        return int(min(100 * 1024 * 1024, (cap * 3) // 4))
    except Exception:
        return 64 * 1024 * 1024


def _pick_key_tile(S, C, compute_dtype, vmem_limit):
    """Key/value-axis tile (must divide S).  Budgeted so that the streamed
    (key_tile, C) x rows (double-buffered) plus ~3 f32 (S, key_tile) softmax
    temporaries use about half of the scoped-VMEM limit."""
    if S <= 512:
        return S
    itemsize = jnp.dtype(compute_dtype).itemsize
    per_col = 3 * 4 * S + 2 * C * itemsize
    cap_cols = max(256, (vmem_limit // 2) // per_col)
    best = None
    for cand in range(256, min(S, 4096) + 1, 256):
        if cand > cap_cols:
            break
        if S % cand == 0:
            best = cand
    return best if best is not None else S


# ---------------------------------------------------------------------------
# Phase 1: q = (x @ wq) * sqrt(dk)   (own grid; x is never resident later)
# ---------------------------------------------------------------------------

def _q_proj_kernel(scale, x_ref, wq_ref, q_ref):
    # Score scale folded into the small (rows, dk_pad) tensor once here,
    # instead of into the (S, S) score matrix.
    q = jnp.dot(x_ref[...], wq_ref[...], preferred_element_type=jnp.float32)
    q_ref[...] = (q * scale).astype(q_ref.dtype)


def _q_projection(x, wq_pad, scale, compute_dtype, vmem_limit):
    S, C = x.shape
    _, dkp = wq_pad.shape
    row_tile = S
    if S > 1024:
        for cand in range(1024, 127, -128):
            if S % cand == 0:
                row_tile = cand
                break
    return pl.pallas_call(
        functools.partial(_q_proj_kernel, scale),
        out_shape=jax.ShapeDtypeStruct((S, dkp), compute_dtype),
        grid_spec=pltpu.PrefetchScalarGridSpec(
            num_scalar_prefetch=0,
            grid=(S // row_tile,),
            in_specs=[
                pl.BlockSpec((row_tile, C), lambda i: (i, 0)),
                pl.BlockSpec((C, dkp), lambda i: (0, 0)),
            ],
            out_specs=pl.BlockSpec((row_tile, dkp), lambda i: (i, 0)),
        ),
        compiler_params=pltpu.CompilerParams(
            dimension_semantics=("parallel",),
            vmem_limit_bytes=vmem_limit,
        ),
    )(x, wq_pad)


# ---------------------------------------------------------------------------
# Phase 2: attention over key/value column tiles
# ---------------------------------------------------------------------------

def _attn_kernel(exp_dtype, x_kv_ref, q_ref, wk_ref, wv_ref, o_ref):
    """One key/value column tile of the SxS score matrix per grid step.

    x_kv_ref: (TN, C)   rows of x belonging to this k/v tile (streamed)
    q_ref   : (S, dkp)  q * sqrt(dk), compute dtype (constant block)
    wk_ref  : (C, dkp)  key weight (constant block)
    wv_ref  : (C, dkp)  value weight (constant block)
    o_ref   : (S, dkp)  f32 output; constant index -> VMEM-resident accumulator
    """
    j = pl.program_id(0)
    cdt = q_ref.dtype

    @pl.when(j == 0)
    def _init():
        o_ref[...] = jnp.zeros_like(o_ref)

    xkv = x_kv_ref[...]
    # Two narrow projections against separate weight refs: k and v come out of
    # the MXU already separated (no value-level slicing of a fused result).
    k = jnp.dot(xkv, wk_ref[...], preferred_element_type=jnp.float32).astype(cdt)
    v = jnp.dot(xkv, wv_ref[...], preferred_element_type=jnp.float32).astype(cdt)

    # Score tile (S, TN) = (q * sqrt(dk)) @ k^T — transposed contraction runs
    # directly on the MXU (no materialized transpose).
    s = jax.lax.dot_general(
        q_ref[...], k,
        dimension_numbers=(((1,), (1,)), ((), ())),
        preferred_element_type=jnp.float32)

    # softmax over dim=0 — exact within the tile: every column of this score
    # tile has all S rows resident, so no cross-tile max/sum is needed.
    m = jnp.max(s, axis=0, keepdims=True)
    e = jnp.exp((s - m).astype(exp_dtype)).astype(jnp.float32)
    denom = jnp.sum(e, axis=0, keepdims=True)             # (1, TN)
    p = e * pl.reciprocal(denom, approx=False)            # exact; tiny operand

    # out += softmax(scores)[:, tile] @ v[tile]  (f32 accumulation in o_ref)
    o_ref[...] += jnp.dot(p.astype(cdt), v, preferred_element_type=jnp.float32)


def _attention(x, q, wk_pad, wv_pad, key_tile, vmem_limit, exp_dtype,
               single_buffer_constants, kv_buffers=None):
    S, C = x.shape
    _, dkp = wk_pad.shape
    n_kv_tiles = S // key_tile

    def const_spec(shape):
        # Constant-index blocks are never re-fetched; single-buffer them to
        # halve their VMEM footprint.
        if single_buffer_constants:
            return pl.BlockSpec(shape, lambda j: (0, 0),
                                pipeline_mode=pl.Buffered(1))
        return pl.BlockSpec(shape, lambda j: (0, 0))

    if kv_buffers is None:
        xkv_spec = pl.BlockSpec((key_tile, C), lambda j: (j, 0))
    else:
        # Optional deeper pipelining of the streamed x tile (e.g. 3 when dk is
        # small and per-step compute does not cover the (key_tile, C) fetch).
        xkv_spec = pl.BlockSpec((key_tile, C), lambda j: (j, 0),
                                pipeline_mode=pl.Buffered(kv_buffers))

    return pl.pallas_call(
        functools.partial(_attn_kernel, exp_dtype),
        out_shape=jax.ShapeDtypeStruct((S, dkp), jnp.float32),
        grid_spec=pltpu.PrefetchScalarGridSpec(
            num_scalar_prefetch=0,
            grid=(n_kv_tiles,),
            in_specs=[
                xkv_spec,                 # x rows for this k/v tile (streamed)
                const_spec((S, dkp)),     # q * sqrt(dk)
                const_spec((C, dkp)),     # wk
                const_spec((C, dkp)),     # wv
            ],
            out_specs=const_spec((S, dkp)),
        ),
        compiler_params=pltpu.CompilerParams(
            # kv-tile axis is a reduction into one resident output block.
            dimension_semantics=("arbitrary",),
            vmem_limit_bytes=vmem_limit,
        ),
    )(x, q, wk_pad, wv_pad)


# ---------------------------------------------------------------------------
# Public wrapper
# ---------------------------------------------------------------------------

def self_attention_forward(x, wq, wk, wv, dk, *,
                           key_tile=None, compute_dtype=jnp.bfloat16,
                           exp_dtype=None, kv_buffers=None):
    S, C = x.shape
    assert wq.shape == (C, dk) and wk.shape == (C, dk) and wv.shape == (C, dk)
    scale = math.sqrt(dk)
    vmem_limit = _vmem_limit_bytes()

    # Lane-dense head dim: pad dk up to a multiple of 128 with zero columns so
    # q/k/v/out stores are unmasked and the MXU N dimension is full; the padded
    # columns contribute exactly 0 to the scores and are sliced off the output.
    dkp = ((dk + 127) // 128) * 128
    pad = ((0, 0), (0, dkp - dk))
    wq_p = jnp.pad(wq, pad).astype(compute_dtype)
    wk_p = jnp.pad(wk, pad).astype(compute_dtype)
    wv_p = jnp.pad(wv, pad).astype(compute_dtype)
    x_c = x.astype(compute_dtype)

    # Key/value-axis tile (must divide S).  User-supplied tiles are validated
    # (no silent fallback); bf16 needs multiples of 16 (two rows per sublane).
    if key_tile is None:
        key_tile = _pick_key_tile(S, C, compute_dtype, vmem_limit)
    else:
        row_pack = 16 if jnp.dtype(compute_dtype).itemsize == 2 else 8
        assert S % key_tile == 0, f"key_tile={key_tile} must divide S={S}"
        assert key_tile == S or key_tile % row_pack == 0, (
            f"key_tile={key_tile} must be a multiple of {row_pack} for "
            f"{jnp.dtype(compute_dtype).name}")

    # exp dtype: bf16 exp ~doubles EUP throughput on v6e/v7x; pass
    # exp_dtype=jnp.float32 on v5e (no bf16 EUP) or for a strict-f32 path.
    if exp_dtype is None:
        exp_dtype = compute_dtype

    # Phase 1: q projection on its own grid, so the (S, C) x block is never
    # kept resident across the kv reduction.
    q = _q_projection(x_c, wq_p, scale, compute_dtype, vmem_limit)

    try:
        out = _attention(x_c, q, wk_p, wv_p, key_tile, vmem_limit, exp_dtype,
                         single_buffer_constants=True, kv_buffers=kv_buffers)
    except Exception:
        # pipeline_mode=pl.Buffered(1) not supported on this jax build — fall
        # back to default buffering (constant blocks are small now that q is
        # precomputed, so this only costs a modest amount of extra VMEM).
        out = _attention(x_c, q, wk_p, wv_p, key_tile, vmem_limit, exp_dtype,
                         single_buffer_constants=False, kv_buffers=kv_buffers)

    return out[:, :dk].astype(x.dtype)


def self_attention_reference(x, wq, wk, wv, dk):
    q = x @ wq
    k = x @ wk
    v = x @ wv
    t0 = q @ k.T * math.sqrt(dk)
    t1 = jax.nn.softmax(t0, axis=0)
    return t1 @ v


if __name__ == "__main__":
    # Shapes consistent with the module: x is (seq, ctxLen), weights (ctxLen, dk).
    S, CTX_LEN, DK = 8, 16, 32

    key = jax.random.PRNGKey(0)
    kx, kq, kk, kv = jax.random.split(key, 4)

    x = jax.random.normal(kx, (S, CTX_LEN), dtype=jnp.float32)
    # Deterministic parameter init mirroring torch.rand(shape) * 0.05
    wq = jax.random.uniform(kq, (CTX_LEN, DK), dtype=jnp.float32) * 0.05
    wk = jax.random.uniform(kk, (CTX_LEN, DK), dtype=jnp.float32) * 0.05
    wv = jax.random.uniform(kv, (CTX_LEN, DK), dtype=jnp.float32) * 0.05

    ref = self_attention_reference(x, wq, wk, wv, DK)

    # Strict f32 path: tight tolerance (f32 MXU feeds, f32 exp, exact recip).
    out_f32 = jax.block_until_ready(
        self_attention_forward(x, wq, wk, wv, DK, compute_dtype=jnp.float32))
    assert out_f32.shape == (S, DK)
    assert jnp.allclose(out_f32, ref, atol=1e-5, rtol=1e-5), "f32 path mismatch"

    # Default fast path: bf16 MXU feeds / bf16 exp with f32 accumulation.
    out_bf16 = jax.block_until_ready(self_attention_forward(x, wq, wk, wv, DK))
    assert out_bf16.shape == (S, DK)
    assert jnp.allclose(out_bf16, ref, atol=2e-2, rtol=2e-2), "bf16 path mismatch"

    print("KERNEL_OK")
</pallas_src>

<mosaic_0001>
module attributes {stable_mosaic.version = 11 : i64} {
  func.func @_q_proj_kernel(%arg0: i32, %arg1: memref<8x16xf32, #tpu.memory_space<vmem>>, %arg2: memref<16x128xf32, #tpu.memory_space<vmem>>, %arg3: memref<8x128xf32, #tpu.memory_space<vmem>>) attributes {dimension_semantics = [#tpu.dimension_semantics<parallel>], iteration_bounds = array<i64: 1>, scalar_prefetch = 0 : i64, scratch_operands = 0 : i64, tpu.core_type = #tpu.core_type<tc>, window_params = [{transform_indices = @transform_0, window_bounds = array<i64: 8, 16>}, {pipeline_mode = #tpu.pipeline_mode<synchronous>, transform_indices = @transform_1, window_bounds = array<i64: 16, 128>}, {transform_indices = @transform_2, window_bounds = array<i64: 8, 128>}]} {
    %c0 = arith.constant 0 : index
    %c0_0 = arith.constant 0 : index
    %0 = vector.load %arg1[%c0, %c0_0] : memref<8x16xf32, #tpu.memory_space<vmem>>, vector<8x16xf32>
    %c0_1 = arith.constant 0 : index
    %c0_2 = arith.constant 0 : index
    %1 = vector.load %arg2[%c0_1, %c0_2] : memref<16x128xf32, #tpu.memory_space<vmem>>, vector<16x128xf32>
    %cst = arith.constant dense<0.000000e+00> : vector<8x128xf32>
    %2 = tpu.matmul %0, %1, %cst {dimension_numbers = #tpu.dot_dimension_numbers<[1], [0], [0], [1], [0, 0, 1, 1], [], []>} : vector<8x16xf32>, vector<16x128xf32>, vector<8x128xf32> -> vector<8x128xf32>
    %cst_3 = arith.constant 5.65685415 : f32
    %3 = vector.broadcast %cst_3 : f32 to vector<8x128xf32>
    %4 = arith.mulf %2, %3 : vector<8x128xf32>
    %c0_4 = arith.constant 0 : index
    %c0_5 = arith.constant 0 : index
    %5 = vector.load %arg3[%c0_4, %c0_5] : memref<8x128xf32, #tpu.memory_space<vmem>>, vector<8x128xf32>
    tpu.vector_store %arg3[%c0_4, %c0_5], %4 {strides = array<i32>} : memref<8x128xf32, #tpu.memory_space<vmem>>, vector<8x128xf32>,
    return
  }
  func.func @transform_0(%arg0: i32) -> (i32, i32) {
    %c0_i32 = arith.constant 0 : i32
    %c0_i32_0 = arith.constant 0 : i32
    return %arg0, %c0_i32 : i32, i32
  }
  func.func @transform_1(%arg0: i32) -> (i32, i32) {
    %c0_i32 = arith.constant 0 : i32
    %c0_i32_0 = arith.constant 0 : i32
    %c0_i32_1 = arith.constant 0 : i32
    return %c0_i32, %c0_i32_0 : i32, i32
  }
  func.func @transform_2(%arg0: i32) -> (i32, i32) {
    %c0_i32 = arith.constant 0 : i32
    %c0_i32_0 = arith.constant 0 : i32
    return %arg0, %c0_i32 : i32, i32
  }
}

</mosaic_0001>

<llo_original>
// kernel: tpu_custom_call.1
$region0: #{tpu_custom_call.1}
  #allocation0 [shape = 'u32[]', space=smem, size = 0x4, offset = 0x4, fixed_abs, tag = 'smem constant byte address 0x4 - core index']
  #allocation1 [shape = 'u32[72,128]{1,0:T(1,128)}', space=vmem, size = 0x9000, scoped, tag = 'internal scratch']
  %s0 = inlined_call_operand.hbm [shape: f32[8,16], index: 0, kind: input, shape index: {}]
  %s1 = inlined_call_operand.hbm [shape: f32[16,128], index: 1, kind: input, shape index: {}]
  %s2 = inlined_call_operand.hbm [shape: f32[8,128], index: 2, kind: output, shape index: {}]
  %s3 = sld [smem:[#allocation0]]
  $region26: #{tpu_custom_call.1} parent=0
    _
  %s5 = ssub.s32 1, %s3
  %s6 = scalar_select 0, %s5, %s3
  $region1: #{tpu_custom_call.1} parent=0
    #allocation2 [shape = 'u8[4096]{0}', space=vmem, size = 0x1000, scoped, tag = 'input window, operand 0, single buffered']
    #allocation3 [shape = 's32[1]{0}', space=sflag, size = 0x4, scoped, tag = 'scoped memory for tpu_custom_call.1']
    #allocation4 [shape = 's32[1]{0}', space=sflag, size = 0x4, scoped, tag = 'scoped memory for tpu_custom_call.1']
    #allocation5 [shape = 'u8[8192]{0}', space=vmem, size = 0x2000, scoped, tag = 'input window, operand 1, single buffered']
    #allocation6 [shape = 's32[1]{0}', space=sflag, size = 0x4, scoped, tag = 'scoped memory for tpu_custom_call.1']
    #allocation7 [shape = 'u8[4096]{0}', space=vmem, size = 0x1000, scoped, tag = 'output window, operand 0, single buffered']
    %7 = vsyncpa [#allocation3], 0
    %8 = vsyncpa [#allocation6], 0
    %9 = vsyncpa [#allocation4], 0
    // Predicated region
    $region2: #{tpu_custom_call.1} parent=1 // pred_check
      _
    $region3: #{tpu_custom_call.1} parent=1 // pred_check_branch
      %11 = sbr.rel (0) target = $region5
    $region4: #{tpu_custom_call.1} parent=1 // pred_region
      %13 = vsyncadd [#allocation3], 0
      %s15 = sshll.u32 %s0, 4
      %s16 = int_to_ptr.hbm [resolvable:$true] %s15
      %s17 = sshll.u32 [#allocation2], 4
      %s18 = int_to_ptr.vmem [resolvable:$true] %s17
      %20 = dma.hbm_to_vmem [thread:$0]  %s16, 128, %s18, [#allocation3]
    $region5: #{tpu_custom_call.1} parent=1 // pred_fallthru
      _
    // Predicated region
    $region6: #{tpu_custom_call.1} parent=1 // pred_check
      _
    $region7: #{tpu_custom_call.1} parent=1 // pred_check_branch
      %22 = sbr.rel (0) target = $region9
    $region8: #{tpu_custom_call.1} parent=1 // pred_region
      %24 = vsyncadd [#allocation6], 0
      %s25 = sshll.u32 %s1, 4
      %s26 = int_to_ptr.hbm [resolvable:$true] %s25
      %s27 = sshll.u32 [#allocation5], 4
      %s28 = int_to_ptr.vmem [resolvable:$true] %s27
      %33 = dma.hbm_to_vmem [thread:$0]  %s26, 256, %s28, [#allocation6], 128, 128, 8
    $region9: #{tpu_custom_call.1} parent=1 // pred_fallthru
      _
    // Predicated region
    $region10: #{tpu_custom_call.1} parent=1 // pred_check
      _
    $region11: #{tpu_custom_call.1} parent=1 // pred_check_branch
      %35 = sbr.rel (0) target = $region13
    $region12: #{tpu_custom_call.1} parent=1 // pred_region
      %37 = dma.done [#allocation3], 128
    $region13: #{tpu_custom_call.1} parent=1 // pred_fallthru
      _
    // Predicated region
    $region14: #{tpu_custom_call.1} parent=1 // pred_check
      _
    $region15: #{tpu_custom_call.1} parent=1 // pred_check_branch
      %39 = sbr.rel (0) target = $region17
    $region16: #{tpu_custom_call.1} parent=1 // pred_region
      %41 = dma.done [#allocation6], 256
    $region17: #{tpu_custom_call.1} parent=1 // pred_fallthru
      _
    %v42 = vld [vmem:[#allocation2] sm:$0xff]
    %v43 = vld [vmem:[#allocation5] sm:$0xff]
    %v44 = vld [vmem:[#allocation5 + $0x8] sm:$0xff]
    %vm45 = vcmask 130048
    %v47 = vsel %vm45, %v42, 0
    %49 = vmatpush.msra.mxu0 0.0
    %50 = vmatpush.msra.mxu0 0.0
    %51 = vmatpush.msra.mxu0 0.0
    %52 = vmatpush.msra.mxu0 0.0
    %53 = vmatpush.msra.mxu0 0.0
    %54 = vmatpush.msra.mxu0 0.0
    %55 = vmatpush.msra.mxu0 0.0
    %56 = vmatpush.msra.mxu0 0.0
    %57 = vmatpush.msra.mxu0 0.0
    %58 = vmatpush.msra.mxu0 0.0
    %59 = vmatpush.msra.mxu0 0.0
    %60 = vmatpush.msra.mxu0 0.0
    %61 = vmatpush.msra.mxu0 0.0
    %62 = vmatpush.msra.mxu0 0.0
    %63 = vmatpush.msra.mxu0 %v44
    %64 = vmatpush.msra.mxu0 %v43
    %65 = vmatmul.f32.gmra.mxu0 %v47
    %v66 = vpop.f32.mrf.mxu0
    %v67 = vadd.f32 0.0, %v66
    %68 = vdwg.mxu0
    %v69 = vmul.f32 %v67, 5.656854
    %70 = vst [vmem:[#allocation7] sm:$0xff] %v69
    // Predicated region
    $region18: #{tpu_custom_call.1} parent=1 // pred_check
      _
    $region19: #{tpu_custom_call.1} parent=1 // pred_check_branch
      %72 = sbr.rel (0) target = $region21
    $region20: #{tpu_custom_call.1} parent=1 // pred_region
      %74 = vsyncadd [#allocation4], 0
      %s76 = sshll.u32 [#allocation7], 4
      %s77 = int_to_ptr.vmem [resolvable:$true] %s76
      %s78 = sshll.u32 %s2, 4
      %s79 = int_to_ptr.hbm [resolvable:$true] %s78
      %81 = dma.vmem_to_hbm [thread:$0]  %s77, 128, %s79, [#allocation4]
    $region21: #{tpu_custom_call.1} parent=1 // pred_fallthru
      _
    // Predicated region
    $region22: #{tpu_custom_call.1} parent=1 // pred_check
      _
    $region23: #{tpu_custom_call.1} parent=1 // pred_check_branch
      %83 = sbr.rel (0) target = $region25
    $region24: #{tpu_custom_call.1} parent=1 // pred_region
      %85 = dma.done [#allocation4], 128
    $region25: #{tpu_custom_call.1} parent=1 // pred_fallthru
      _
    %86 = vsyncpa [#allocation3], 1
    %87 = vsyncpa [#allocation6], 1
    %88 = vsyncpa [#allocation4], 1

</llo_original>
